<compile_context>
chip_gen: v7x
topology: tpu7x:2x2x1
jax: 0.10.0
libtpu: 0.0.40
codegen_flags: <defaults>
</compile_context>

<pallas_src>
import math
import functools

import jax
import jax.numpy as jnp
from jax import lax
from jax.experimental import pallas as pl
from jax.experimental.pallas import tpu as pltpu

LANE = 128
SUBLANE = 8


# --------------------------------------------------------------------------
# Hardware budget (generation-aware) and tiling helpers
# --------------------------------------------------------------------------
@functools.lru_cache(maxsize=None)
def _hw_budget():
    """(vmem_limit_bytes, per-big-input-block target bytes).

    Derived from physical VMEM so the same code sizes itself on v5e/v6e (128 MiB)
    and v7x (64 MiB)."""
    cap = 64 << 20                      # conservative default (v7x per-core VMEM)
    try:
        info = pltpu.get_tpu_info()
        cap_attr = getattr(info, "vmem_capacity_bytes", None)
        if cap_attr:
            cap = int(cap_attr)
    except Exception:
        pass
    limit = int(min(cap * 3 // 4, 64 << 20))   # explicit scoped-VMEM limit, < physical
    # Kernel A needs ~5x the big-input block (2 inputs double-buffered + 1/C output);
    # limit//12 leaves ample headroom.  4 MiB blocks keep the ~0.35us/step grid
    # overhead <10% even at v7x's ~3.2 TB/s HBM.
    target = int(max(SUBLANE * LANE * 4, min(4 << 20, limit // 12)))
    return limit, target


def _pick_block_rows(n_rows, c, elem_bytes, target_bytes):
    """Rows (of 128 lanes) per block so a (1, c, rows, 128) input block is ~target_bytes.

    rows is a multiple of 8 (sublane) or the full extent, so there is no hidden
    (8,128) padding and the VMEM accounting is exact."""
    rows = target_bytes // max(1, c * elem_bytes * LANE)
    rows = max(SUBLANE, (int(rows) // SUBLANE) * SUBLANE)
    return n_rows if rows >= n_rows else rows


# --------------------------------------------------------------------------
# Kernel A: clamp(mean_c(k * (mv1 - mv2)^2), 0, 1)
# --------------------------------------------------------------------------
def _mask_gt_kernel(mv1_ref, mv2_ref, o_ref, *, scale):
    a = mv1_ref[...].astype(jnp.float32)          # (1, C, R, 128)
    b = mv2_ref[...].astype(jnp.float32)
    d = a - b
    # Channel sum over a leading dim = C dense vreg-adds; k/C folded into one scalar.
    m = jnp.sum(d * d, axis=1, keepdims=True) * scale
    # Rows of the (cdiv) last block that overrun the array hold undefined data; their
    # results land in the out-of-bounds part of the output block and are dropped.
    o_ref[...] = jnp.clip(m, 0.0, 1.0)            # (1, 1, R, 128)


def _run_mask_gt(mv1r, mv2r, k, target_bytes):
    nt, c, n_rows, _ = mv1r.shape
    elem = mv1r.dtype.itemsize
    limit, _ = _hw_budget()
    blk_rows = _pick_block_rows(n_rows, c, elem, target_bytes)
    row_steps = pl.cdiv(n_rows, blk_rows)

    cost = pl.CostEstimate(
        flops=4 * nt * c * n_rows * LANE,
        transcendentals=0,
        bytes_accessed=2 * nt * c * n_rows * LANE * elem + nt * n_rows * LANE * 4)

    return pl.pallas_call(
        functools.partial(_mask_gt_kernel, scale=float(k) / float(c)),
        out_shape=jax.ShapeDtypeStruct((nt, 1, n_rows, LANE), jnp.float32),
        grid_spec=pltpu.PrefetchScalarGridSpec(
            num_scalar_prefetch=0,
            grid=(nt, row_steps),
            in_specs=[
                pl.BlockSpec((1, c, blk_rows, LANE), lambda b, j: (b, 0, j, 0)),
                pl.BlockSpec((1, c, blk_rows, LANE), lambda b, j: (b, 0, j, 0)),
            ],
            out_specs=pl.BlockSpec((1, 1, blk_rows, LANE), lambda b, j: (b, 0, j, 0)),
        ),
        compiler_params=pltpu.CompilerParams(
            dimension_semantics=("parallel", "parallel"),
            vmem_limit_bytes=limit),
        cost_estimate=cost,
    )(mv1r, mv2r)


# --------------------------------------------------------------------------
# Kernel B: per-sample sum of |pred - mask_gt| (mask broadcast over C)
# --------------------------------------------------------------------------
def _l1_partial_kernel(p_ref, t_ref, o_ref, *, blk_rows, n_rows, inner, fold):
    s = pl.program_id(1)                 # 2-way split of the spatial reduction
    j = pl.program_id(2)                 # reduction axis (last, "arbitrary")

    @pl.when(j == 0)
    def _():
        o_ref[...] = jnp.zeros_like(o_ref)

    # Logical row-block index (unclamped) -> mask for the partial / duplicate block.
    logical = s * inner + j
    rows_valid = n_rows - logical * blk_rows
    row_ok = lax.broadcasted_iota(jnp.int32, (blk_rows, LANE), 0) < rows_valid

    p = p_ref[...].astype(jnp.float32)   # (1, C, R, 128)
    t = t_ref[...].astype(jnp.float32)   # (1, 1, R, 128), broadcast over C in-register
    d = jnp.sum(jnp.abs(p - t), axis=1)  # (1, R, 128)  -- C vreg-adds
    d = jnp.where(row_ok[None], d, 0.0)
    if fold:
        # Fold the lane-dense partial down to one native (8,128) tile: VPU adds along
        # the leading group axis; keeps the resident accumulator / HBM output tiny.
        d = d.reshape(1, blk_rows // SUBLANE, SUBLANE, LANE).sum(axis=1)
    o_ref[...] += d[:, None, :, :]       # (1, 1, acc_rows, 128)


def _run_l1_partial(predr, maskr, target_bytes):
    nt, c, n_rows, _ = predr.shape
    elem = predr.dtype.itemsize
    limit, _ = _hw_budget()
    blk_rows = _pick_block_rows(n_rows, c, elem, target_bytes)
    row_steps = pl.cdiv(n_rows, blk_rows)
    split = 2 if row_steps >= 2 else 1   # keeps both v7x TCs busy at small n*t
    inner = pl.cdiv(row_steps, split)
    fold = (blk_rows % SUBLANE == 0)
    acc_rows = SUBLANE if fold else blk_rows

    def row_block(s, j):
        # Clamp the odd-tail duplicate to the previous block index: the pipeline sees
        # an unchanged index and elides the DMA; the kernel masks its contribution.
        return jnp.minimum(s * inner + j, row_steps - 1)

    cost = pl.CostEstimate(
        flops=4 * nt * c * n_rows * LANE,
        transcendentals=0,
        bytes_accessed=(nt * c * n_rows * LANE * elem + nt * n_rows * LANE * 4
                        + nt * split * acc_rows * LANE * 4))

    partial = pl.pallas_call(
        functools.partial(_l1_partial_kernel, blk_rows=blk_rows, n_rows=n_rows,
                          inner=inner, fold=fold),
        out_shape=jax.ShapeDtypeStruct((nt, split, acc_rows, LANE), jnp.float32),
        grid_spec=pltpu.PrefetchScalarGridSpec(
            num_scalar_prefetch=0,
            grid=(nt, split, inner),
            in_specs=[
                pl.BlockSpec((1, c, blk_rows, LANE),
                             lambda b, s, j: (b, 0, row_block(s, j), 0)),
                pl.BlockSpec((1, 1, blk_rows, LANE),
                             lambda b, s, j: (b, 0, row_block(s, j), 0)),
            ],
            out_specs=pl.BlockSpec((1, 1, acc_rows, LANE),
                                   lambda b, s, j: (b, s, 0, 0)),
        ),
        compiler_params=pltpu.CompilerParams(
            dimension_semantics=("parallel", "parallel", "arbitrary"),
            vmem_limit_bytes=limit),
        cost_estimate=cost,
    )(predr, maskr)
    # (nt,) per-sample sums of |pred - mask_gt| over (C, H, W)
    return jnp.sum(partial, axis=(1, 2, 3))


# --------------------------------------------------------------------------
# Gaussian blur (separable; matches MaskLoss.get_gaussian_kernel, channels=1)
# --------------------------------------------------------------------------
def _gaussian_1d(kernel_size=7, sigma=3.0):
    coords = jnp.arange(kernel_size, dtype=jnp.float32)
    mean = (kernel_size - 1) / 2.0
    g = jnp.exp(-((coords - mean) ** 2) / (2.0 * float(sigma) ** 2))
    # outer(g1, g1) == the torch 2-D kernel after its normalization (exactly separable).
    return g / jnp.sum(g)


def _gaussian_blur_separable(x_nchw, g1):
    # TODO(synk): the tiny 1-channel blur / threshold glue stays as XLA ops (a Pallas
    # halo kernel fused with the '1 - blur' and hw-mean would save one small HBM pass).
    ks = g1.shape[0]
    pad = ks // 2
    x = x_nchw.astype(jnp.float32)
    x = lax.conv_general_dilated(x, g1.reshape(1, 1, ks, 1), (1, 1),
                                 ((pad, pad), (0, 0)),
                                 dimension_numbers=("NCHW", "OIHW", "NCHW"))
    x = lax.conv_general_dilated(x, g1.reshape(1, 1, 1, ks), (1, 1),
                                 ((0, 0), (pad, pad)),
                                 dimension_numbers=("NCHW", "OIHW", "NCHW"))
    return x


# --------------------------------------------------------------------------
# MaskLoss forward
# --------------------------------------------------------------------------
def _mask_loss_forward(pred, mv1, mv2, g1, *, k, loss_weight, target_block_bytes):
    n, t, c_mv, h, w = mv1.shape
    c_pred = pred.shape[2]
    nt, hw = n * t, h * w

    if target_block_bytes is None:
        target_block_bytes = _hw_budget()[1]

    hw_pad = ((hw + LANE - 1) // LANE) * LANE
    n_rows = hw_pad // LANE

    def to_rows(x_flat):
        # Free reshape when h*w % 128 == 0 (common case); otherwise a single
        # materialized zero-pad copy keeps the dense (rows, 128) tiling possible.
        if hw_pad != hw:
            x_flat = jnp.pad(x_flat, ((0, 0), (0, 0), (0, hw_pad - hw)))
        return x_flat.reshape(x_flat.shape[0], x_flat.shape[1], n_rows, LANE)

    # ---- mask construction (the torch.no_grad() block) ----
    mask_sq = _run_mask_gt(to_rows(mv1.reshape(nt, c_mv, hw)),
                           to_rows(mv2.reshape(nt, c_mv, hw)),
                           k, target_block_bytes)                   # (nt,1,n_rows,128)
    mask_sq = mask_sq.reshape(nt, 1, hw_pad)[:, :, :hw].reshape(nt, 1, h, w)
    mask_gt = 1.0 - _gaussian_blur_separable(mask_sq, g1)           # (nt,1,h,w) f32
    mask_value = jnp.mean(mask_gt, axis=(1, 2, 3)) < 0.6            # (nt,) bool

    # ---- masked L1, reduction='mean', weight=None (parent L1Loss path) ----
    # For mask_value in {0, 1}: |pred*mv - mask_gt*mv| == mv * |pred - mask_gt| exactly,
    # so the per-sample gate is applied to the per-sample sums in the wrapper.
    per_sample = _run_l1_partial(to_rows(pred.reshape(nt, c_pred, hw)),
                                 to_rows(mask_gt.reshape(nt, 1, hw)),
                                 target_block_bytes)                # (nt,)
    total = jnp.sum(per_sample * mask_value.astype(jnp.float32))
    denom = float(n * t * c_pred * h * w)   # broadcast loss shape (n, t, c, h, w)
    return (loss_weight * total / denom).astype(jnp.float32)


class MaskLoss:
    """Pallas/JAX port of mmedit EGOVSR MaskLoss (forward only).

    Parent L1Loss configuration is fixed by the original module: loss_weight as given,
    reduction='mean', sample_wise=False, weight=None.
    """

    def __init__(self, loss_weight=1.0, k=1000, target_block_bytes=None):
        self.loss_weight = float(loss_weight)
        self.k = k
        self.reduction = "mean"
        self.sample_wise = False
        self.g1 = _gaussian_1d(kernel_size=7, sigma=3.0)
        self._fwd = jax.jit(functools.partial(
            _mask_loss_forward, k=float(k), loss_weight=float(loss_weight),
            target_block_bytes=target_block_bytes))

    def __call__(self, pred, mv1, mv2):
        return self._fwd(pred, mv1, mv2, self.g1)


# --------------------------------------------------------------------------
# Pure-JAX reference (mirrors the PyTorch forward, dense 7x7 conv) + smoke tests
# --------------------------------------------------------------------------
def _gaussian_kernel_2d(kernel_size=7, sigma=3.0):
    coords = jnp.arange(kernel_size, dtype=jnp.float32)
    xg = jnp.tile(coords, (kernel_size, 1))
    yg = xg.T
    mean = (kernel_size - 1) / 2.0
    var = float(sigma) ** 2
    g = (1.0 / (2.0 * math.pi * var)) * jnp.exp(
        -((xg - mean) ** 2 + (yg - mean) ** 2) / (2.0 * var))
    return g / jnp.sum(g)


def _reference_mask_loss(pred, mv1, mv2, k, loss_weight):
    n, t, c, h, w = mv1.shape
    gk = _gaussian_kernel_2d(7, 3.0)
    d = jnp.abs(mv1 - mv2)
    mask_gt = jnp.mean(d * d * k, axis=2, keepdims=True)                  # (n,t,1,h,w)
    mask_gt = jnp.clip(mask_gt, 0.0, 1.0).reshape(n * t, 1, h, w)
    blurred = lax.conv_general_dilated(
        mask_gt.astype(jnp.float32), gk.reshape(1, 1, 7, 7), (1, 1),
        ((3, 3), (3, 3)), dimension_numbers=("NCHW", "OIHW", "NCHW"))
    mask_gt = (1.0 - blurred).reshape(n, t, 1, h, w)
    mask_value = (jnp.mean(mask_gt, axis=(3, 4), keepdims=True) < 0.6).astype(pred.dtype)
    loss = jnp.abs(pred * mask_value - mask_gt * mask_value)              # broadcast c
    return loss_weight * jnp.mean(loss)


if __name__ == "__main__":
    root_key = jax.random.PRNGKey(0)

    def run_case(N, T, C, H, W, case, target_block_bytes=None):
        key = jax.random.fold_in(root_key, case)
        k1, k2, k3 = jax.random.split(key, 3)
        pred = jax.random.normal(k1, (N, T, C, H, W), dtype=jnp.float32)
        mv1 = jax.random.normal(k2, (N, T, C, H, W), dtype=jnp.float32)
        noise = jax.random.normal(k3, (N, T, C, H, W), dtype=jnp.float32)
        # Alternate samples between large and tiny motion-vector differences so the
        # mask_value gate exercises both branches (far from the 0.6 threshold).
        scale = jnp.where(jnp.arange(N * T) % 2 == 0, 1.0, 1e-3).astype(jnp.float32)
        mv2 = mv1 + scale.reshape(N, T, 1, 1, 1) * noise

        loss_fn = MaskLoss(loss_weight=1.0, k=1000,
                           target_block_bytes=target_block_bytes)
        loss = loss_fn(pred, mv1, mv2)
        jax.block_until_ready(loss)

        ref = _reference_mask_loss(pred, mv1, mv2, k=1000, loss_weight=1.0)
        assert jnp.isfinite(loss), loss
        assert jnp.allclose(loss, ref, rtol=1e-5, atol=1e-5), (float(loss), float(ref))

    # Main case: hw % 128 == 0, one row-block per sample.
    run_case(2, 3, 3, 16, 16, case=0)
    # hw % 128 != 0 -> exercises the zero-pad fallback path.
    run_case(2, 2, 3, 10, 10, case=1)
    # Tiny block override -> exercises the cdiv row grid, partial last block + row mask,
    # 2-way TC split with a clamped duplicate block, and the (8,128) accumulator fold.
    run_case(1, 2, 3, 48, 48, case=2, target_block_bytes=3 * SUBLANE * LANE * 4)

    print("KERNEL_OK")
</pallas_src>

<mosaic_0001>
module attributes {stable_mosaic.version = 11 : i64} {
  func.func @_mask_gt_kernel(%arg0: i32, %arg1: i32, %arg2: memref<1x3x2x128xf32, #tpu.memory_space<vmem>>, %arg3: memref<1x3x2x128xf32, #tpu.memory_space<vmem>>, %arg4: memref<1x1x2x128xf32, #tpu.memory_space<vmem>>) attributes {dimension_semantics = [#tpu.dimension_semantics<parallel>, #tpu.dimension_semantics<parallel>], iteration_bounds = array<i64: 6, 1>, scalar_prefetch = 0 : i64, scratch_operands = 0 : i64, tpu.core_type = #tpu.core_type<tc>, window_params = [{transform_indices = @transform_0, window_bounds = array<i64: 1, 3, 2, 128>}, {transform_indices = @transform_1, window_bounds = array<i64: 1, 3, 2, 128>}, {transform_indices = @transform_2, window_bounds = array<i64: 1, 1, 2, 128>}]} {
    %c0 = arith.constant 0 : index
    %c0_0 = arith.constant 0 : index
    %c0_1 = arith.constant 0 : index
    %c0_2 = arith.constant 0 : index
    %0 = vector.load %arg2[%c0, %c0_0, %c0_1, %c0_2] : memref<1x3x2x128xf32, #tpu.memory_space<vmem>>, vector<1x3x2x128xf32>
    %c0_3 = arith.constant 0 : index
    %c0_4 = arith.constant 0 : index
    %c0_5 = arith.constant 0 : index
    %c0_6 = arith.constant 0 : index
    %1 = vector.load %arg3[%c0_3, %c0_4, %c0_5, %c0_6] : memref<1x3x2x128xf32, #tpu.memory_space<vmem>>, vector<1x3x2x128xf32>
    %2 = arith.subf %0, %1 : vector<1x3x2x128xf32>
    %3 = arith.mulf %2, %2 : vector<1x3x2x128xf32>
    %cst = arith.constant dense<0.000000e+00> : vector<1x2x128xf32>
    %4 = vector.multi_reduction <add>, %3, %cst [1] : vector<1x3x2x128xf32> to vector<1x2x128xf32>
    %5 = vector.shape_cast %4 : vector<1x2x128xf32> to vector<1x1x2x128xf32>
    %cst_7 = arith.constant 333.333344 : f32
    %6 = vector.broadcast %cst_7 : f32 to vector<1x1x2x128xf32>
    %7 = arith.mulf %5, %6 : vector<1x1x2x128xf32>
    %cst_8 = arith.constant 0.000000e+00 : f32
    %cst_9 = arith.constant 1.000000e+00 : f32
    %8 = vector.broadcast %cst_8 : f32 to vector<1x1x2x128xf32>
    %9 = arith.maximumf %8, %7 : vector<1x1x2x128xf32>
    %10 = vector.broadcast %cst_9 : f32 to vector<1x1x2x128xf32>
    %11 = arith.minimumf %10, %9 : vector<1x1x2x128xf32>
    %c0_10 = arith.constant 0 : index
    %c0_11 = arith.constant 0 : index
    %c0_12 = arith.constant 0 : index
    %c0_13 = arith.constant 0 : index
    %12 = vector.load %arg4[%c0_10, %c0_11, %c0_12, %c0_13] : memref<1x1x2x128xf32, #tpu.memory_space<vmem>>, vector<1x1x2x128xf32>
    tpu.vector_store %arg4[%c0_10, %c0_11, %c0_12, %c0_13], %11 {strides = array<i32>} : memref<1x1x2x128xf32, #tpu.memory_space<vmem>>, vector<1x1x2x128xf32>,
    return
  }
  func.func @transform_0(%arg0: i32, %arg1: i32) -> (i32, i32, i32, i32) {
    %c0_i32 = arith.constant 0 : i32
    %c0_i32_0 = arith.constant 0 : i32
    %c0_i32_1 = arith.constant 0 : i32
    return %arg0, %c0_i32, %arg1, %c0_i32_0 : i32, i32, i32, i32
  }
  func.func @transform_1(%arg0: i32, %arg1: i32) -> (i32, i32, i32, i32) {
    %c0_i32 = arith.constant 0 : i32
    %c0_i32_0 = arith.constant 0 : i32
    %c0_i32_1 = arith.constant 0 : i32
    return %arg0, %c0_i32, %arg1, %c0_i32_0 : i32, i32, i32, i32
  }
  func.func @transform_2(%arg0: i32, %arg1: i32) -> (i32, i32, i32, i32) {
    %c0_i32 = arith.constant 0 : i32
    %c0_i32_0 = arith.constant 0 : i32
    %c0_i32_1 = arith.constant 0 : i32
    return %arg0, %c0_i32, %arg1, %c0_i32_0 : i32, i32, i32, i32
  }
}

module attributes {stable_mosaic.version = 11 : i64} {
  func.func @_l1_partial_kernel(%arg0: i32, %arg1: i32, %arg2: i32, %arg3: memref<1x3x2x128xf32, #tpu.memory_space<vmem>>, %arg4: memref<1x1x2x128xf32, #tpu.memory_space<vmem>>, %arg5: memref<1x1x2x128xf32, #tpu.memory_space<vmem>>) attributes {dimension_semantics = [#tpu.dimension_semantics<parallel>, #tpu.dimension_semantics<parallel>, #tpu.dimension_semantics<arbitrary>], iteration_bounds = array<i64: 6, 1, 1>, scalar_prefetch = 0 : i64, scratch_operands = 0 : i64, tpu.core_type = #tpu.core_type<tc>, window_params = [{transform_indices = @transform_0, window_bounds = array<i64: 1, 3, 2, 128>}, {transform_indices = @transform_1, window_bounds = array<i64: 1, 1, 2, 128>}, {transform_indices = @transform_2, window_bounds = array<i64: 1, 1, 2, 128>}]} {
    %c0_i32 = arith.constant 0 : i32
    %0 = arith.cmpi eq, %arg2, %c0_i32 : i32
    %1 = arith.extui %0 : i1 to i32
    %c0_i32_0 = arith.constant 0 : i32
    %2 = arith.cmpi ne, %1, %c0_i32_0 : i32
    scf.if %2 {
      %cst_18 = arith.constant 0.000000e+00 : f32
      %23 = vector.broadcast %cst_18 : f32 to vector<1x1x2x128xf32>
      %c0_19 = arith.constant 0 : index
      %c0_20 = arith.constant 0 : index
      %c0_21 = arith.constant 0 : index
      %c0_22 = arith.constant 0 : index
      %24 = vector.load %arg5[%c0_19, %c0_20, %c0_21, %c0_22] : memref<1x1x2x128xf32, #tpu.memory_space<vmem>>, vector<1x1x2x128xf32>
      tpu.vector_store %arg5[%c0_19, %c0_20, %c0_21, %c0_22], %23 {strides = array<i32>} : memref<1x1x2x128xf32, #tpu.memory_space<vmem>>, vector<1x1x2x128xf32>,
    } else {
    }
    %c1_i32 = arith.constant 1 : i32
    %3 = arith.muli %arg1, %c1_i32 : i32
    %4 = arith.addi %3, %arg2 : i32
    %c2_i32 = arith.constant 2 : i32
    %5 = arith.muli %4, %c2_i32 : i32
    %c2_i32_1 = arith.constant 2 : i32
    %6 = arith.subi %c2_i32_1, %5 : i32
    %7 = tpu.iota {dimensions = array<i32: 0>} : vector<2x128xi32>
    %8 = vector.broadcast %6 : i32 to vector<2x128xi32>
    %9 = arith.cmpi slt, %7, %8 : vector<2x128xi32>
    %c0 = arith.constant 0 : index
    %c0_2 = arith.constant 0 : index
    %c0_3 = arith.constant 0 : index
    %c0_4 = arith.constant 0 : index
    %10 = vector.load %arg3[%c0, %c0_2, %c0_3, %c0_4] : memref<1x3x2x128xf32, #tpu.memory_space<vmem>>, vector<1x3x2x128xf32>
    %c0_5 = arith.constant 0 : index
    %c0_6 = arith.constant 0 : index
    %c0_7 = arith.constant 0 : index
    %c0_8 = arith.constant 0 : index
    %11 = vector.load %arg4[%c0_5, %c0_6, %c0_7, %c0_8] : memref<1x1x2x128xf32, #tpu.memory_space<vmem>>, vector<1x1x2x128xf32>
    %12 = vector.broadcast %11 : vector<1x1x2x128xf32> to vector<1x3x2x128xf32>
    %13 = arith.subf %10, %12 : vector<1x3x2x128xf32>
    %14 = math.absf %13 : vector<1x3x2x128xf32>
    %cst = arith.constant dense<0.000000e+00> : vector<1x2x128xf32>
    %15 = vector.multi_reduction <add>, %14, %cst [1] : vector<1x3x2x128xf32> to vector<1x2x128xf32>
    %16 = vector.shape_cast %9 : vector<2x128xi1> to vector<1x2x128xi1>
    %cst_9 = arith.constant 0.000000e+00 : f32
    %17 = vector.broadcast %cst_9 : f32 to vector<1x2x128xf32>
    %18 = arith.select %16, %15, %17 : vector<1x2x128xi1>, vector<1x2x128xf32>
    %c0_10 = arith.constant 0 : index
    %c0_11 = arith.constant 0 : index
    %c0_12 = arith.constant 0 : index
    %c0_13 = arith.constant 0 : index
    %19 = vector.load %arg5[%c0_10, %c0_11, %c0_12, %c0_13] : memref<1x1x2x128xf32, #tpu.memory_space<vmem>>, vector<1x1x2x128xf32>
    %20 = vector.shape_cast %18 : vector<1x2x128xf32> to vector<1x1x2x128xf32>
    %21 = arith.addf %19, %20 : vector<1x1x2x128xf32>
    %c0_14 = arith.constant 0 : index
    %c0_15 = arith.constant 0 : index
    %c0_16 = arith.constant 0 : index
    %c0_17 = arith.constant 0 : index
    %22 = vector.load %arg5[%c0_14, %c0_15, %c0_16, %c0_17] : memref<1x1x2x128xf32, #tpu.memory_space<vmem>>, vector<1x1x2x128xf32>
    tpu.vector_store %arg5[%c0_14, %c0_15, %c0_16, %c0_17], %21 {strides = array<i32>} : memref<1x1x2x128xf32, #tpu.memory_space<vmem>>, vector<1x1x2x128xf32>,
    return
  }
  func.func @transform_0(%arg0: i32, %arg1: i32, %arg2: i32) -> (i32, i32, i32, i32) {
    %c1_i32 = arith.constant 1 : i32
    %0 = arith.muli %arg1, %c1_i32 : i32
    %1 = arith.addi %0, %arg2 : i32
    %c0_i32 = arith.constant 0 : i32
    %2 = arith.minsi %1, %c0_i32 : i32
    %c0_i32_0 = arith.constant 0 : i32
    %c0_i32_1 = arith.constant 0 : i32
    %c0_i32_2 = arith.constant 0 : i32
    return %arg0, %c0_i32_0, %2, %c0_i32_1 : i32, i32, i32, i32
  }
  func.func @transform_1(%arg0: i32, %arg1: i32, %arg2: i32) -> (i32, i32, i32, i32) {
    %c1_i32 = arith.constant 1 : i32
    %0 = arith.muli %arg1, %c1_i32 : i32
    %1 = arith.addi %0, %arg2 : i32
    %c0_i32 = arith.constant 0 : i32
    %2 = arith.minsi %1, %c0_i32 : i32
    %c0_i32_0 = arith.constant 0 : i32
    %c0_i32_1 = arith.constant 0 : i32
    %c0_i32_2 = arith.constant 0 : i32
    return %arg0, %c0_i32_0, %2, %c0_i32_1 : i32, i32, i32, i32
  }
  func.func @transform_2(%arg0: i32, %arg1: i32, %arg2: i32) -> (i32, i32, i32, i32) {
    %c0_i32 = arith.constant 0 : i32
    %c0_i32_0 = arith.constant 0 : i32
    %c0_i32_1 = arith.constant 0 : i32
    return %arg0, %arg1, %c0_i32, %c0_i32_0 : i32, i32, i32, i32
  }
}

</mosaic_0001>

<llo_original>
// kernel: _mask_loss_forward.2
$region0: #{_mask_loss_forward.2}
  #allocation0 [shape = 'u32[]', space=smem, size = 0x4, offset = 0x4, fixed_abs, tag = 'smem constant byte address 0x4 - core index']
  #allocation1 [shape = 'u32[144,128]{1,0:T(1,128)}', space=vmem, size = 0x12000, scoped, tag = 'internal scratch']
  %s0 = inlined_call_operand.vmem [shape: f32[6,3,2,128], index: 0, kind: input, shape index: {}]
  %s1 = inlined_call_operand.vmem [shape: f32[6,3,2,128], index: 1, kind: input, shape index: {}]
  %s2 = inlined_call_operand.vmem [shape: f32[6,1,2,128], index: 2, kind: output, shape index: {}]
  %s3 = sld [smem:[#allocation0]]
  $region41: #{_mask_loss_forward.2} parent=0
    _
  %s5 = ssub.s32 1, %s3
  %s6 = scalar_select 0, %s5, %s3
  loop: start=0, step=1, limit=8
  $region2: #{_mask_loss_forward.2} parent=0 // loop_pre_header
    _
  $region3: #{_mask_loss_forward.2} parent=0 // loop_header
    %s8 = sphi 0, %s12
    %p9 = scmp.ge.s32.totalorder %s8, 8
    %s15 = sphi 0, %s27
    %s16 = sphi 0, %s23
    %s17 = sphi 0, %s15
    %s18 = sphi 0, %s16
    %s19 = sphi 0, %s17
    %s20 = sphi 0, %s18
    %s32 = sphi 0, %s34
    %s35 = sphi 0, %s32
    %s36 = sphi 0, %s35
    %s52 = sphi 0, %s36
    %s60 = sphi 0, %s62
    %s63 = sphi 0, %s60
    %s64 = sphi 0, %s63
    %s80 = sphi 0, %s64
    %s88 = sphi 0, %s90
    %s91 = sphi 0, %s88
    %s92 = sphi 0, %s91
    %s108 = sphi 0, %s92
  $region4: #{_mask_loss_forward.2} parent=0 // loop_header_branch
    %11 = sbr.rel (%p9) target = $region8
  $region5: #{_mask_loss_forward.2} parent=0 // loop_body
    %s13 = ssub.s32 %s8, 1
    %s14 = ssub.s32 %s8, 2
    %s21 = sadd.s32 1, %s16
    %p22 = scmp.ge.s32.totalorder %s21, 1
    %s23 = scalar_select %p22, 0, %s21
    %s24 = sadd.s32 1, %s15
    %s25 = scalar_select %p22, %s24, %s15
    %p26 = scmp.ge.s32.totalorder %s25, 6
    %s27 = scalar_select %p26, 0, %s25
    %s28 = ssub.s32 %s15, %s27
    %s29 = ssub.s32 %s16, %s23
    %s30 = sor.u32 %s28, %s29
    %p31 = scmp.eq.s32.totalorder %s30, 0
    %s33 = sadd.s32 %s32, 1
    %s34 = scalar_select %p31, %s32, %s33
    %p37 = pneg %p31
    %p38 = scmp.eq.s32.totalorder %s8, 5
    %p39 = por %p37, %p38
    %p40 = scmp.ne.s32.totalorder %s32, %s35
    %p41 = scmp.eq.s32.totalorder %s8, 0
    %p42 = por %p40, %p41
    %p43 = scmp.ne.s32.totalorder %s32, %s35
    %p44 = scmp.eq.s32.totalorder %s13, 5
    %p45 = por %p43, %p44
    %p46 = scmp.ne.s32.totalorder %s35, %s36
    %p47 = scmp.eq.s32.totalorder %s13, 0
    %p48 = por %p46, %p47
    %p49 = scmp.ne.s32.totalorder %s35, %s36
    %p50 = scmp.eq.s32.totalorder %s14, 5
    %p51 = por %p49, %p50
    %p53 = scmp.ne.s32.totalorder %s36, %s52
    %p54 = scmp.eq.s32.totalorder %s14, 0
    %p55 = por %p53, %p54
    %s56 = ssub.s32 %s15, %s27
    %s57 = ssub.s32 %s16, %s23
    %s58 = sor.u32 %s56, %s57
    %p59 = scmp.eq.s32.totalorder %s58, 0
    %s61 = sadd.s32 %s60, 1
    %s62 = scalar_select %p59, %s60, %s61
    %p65 = pneg %p59
    %p66 = scmp.eq.s32.totalorder %s8, 5
    %p67 = por %p65, %p66
    %p68 = scmp.ne.s32.totalorder %s60, %s63
    %p69 = scmp.eq.s32.totalorder %s8, 0
    %p70 = por %p68, %p69
    %p71 = scmp.ne.s32.totalorder %s60, %s63
    %p72 = scmp.eq.s32.totalorder %s13, 5
    %p73 = por %p71, %p72
    %p74 = scmp.ne.s32.totalorder %s63, %s64
    %p75 = scmp.eq.s32.totalorder %s13, 0
    %p76 = por %p74, %p75
    %p77 = scmp.ne.s32.totalorder %s63, %s64
    %p78 = scmp.eq.s32.totalorder %s14, 5
    %p79 = por %p77, %p78
    %p81 = scmp.ne.s32.totalorder %s64, %s80
    %p82 = scmp.eq.s32.totalorder %s14, 0
    %p83 = por %p81, %p82
    %s84 = ssub.s32 %s15, %s27
    %s85 = ssub.s32 %s16, %s23
    %s86 = sor.u32 %s84, %s85
    %p87 = scmp.eq.s32.totalorder %s86, 0
    %s89 = sadd.s32 %s88, 1
    %s90 = scalar_select %p87, %s88, %s89
    %p93 = pneg %p87
    %p94 = scmp.eq.s32.totalorder %s8, 5
    %p95 = por %p93, %p94
    %p96 = scmp.ne.s32.totalorder %s88, %s91
    %p97 = scmp.eq.s32.totalorder %s8, 0
    %p98 = por %p96, %p97
    %p99 = scmp.ne.s32.totalorder %s88, %s91
    %p100 = scmp.eq.s32.totalorder %s13, 5
    %p101 = por %p99, %p100
    %p102 = scmp.ne.s32.totalorder %s91, %s92
    %p103 = scmp.eq.s32.totalorder %s13, 0
    %p104 = por %p102, %p103
    %p105 = scmp.ne.s32.totalorder %s91, %s92
    %p106 = scmp.eq.s32.totalorder %s14, 5
    %p107 = por %p105, %p106
    %p109 = scmp.ne.s32.totalorder %s92, %s108
    %p110 = scmp.eq.s32.totalorder %s14, 0
    %p111 = por %p109, %p110
    %p112 = scmp.le.s32.totalorder 1, %s8
    %p113 = scmp.lt.s32.totalorder %s8, 7
    %p114 = pnand %p112, %p113
    %p115 = pneg %p114
    // Predicated region
    $region9: #{_mask_loss_forward.2} parent=5 // pred_check
      _
    $region10: #{_mask_loss_forward.2} parent=5 // pred_check_branch
      %117 = sbr.rel (%p114) target = $region12
    $region11: #{_mask_loss_forward.2} parent=5 // pred_region
      %s118 = ssub.s32 %s8, 1
    $region12: #{_mask_loss_forward.2} parent=5 // pred_fallthru
      _
    %p119 = scmp.lt.s32.totalorder %s8, 6
    // Predicated region
    $region13: #{_mask_loss_forward.2} parent=5 // pred_check
      %p120 = pneg %p119
    $region14: #{_mask_loss_forward.2} parent=5 // pred_check_branch
      %122 = sbr.rel (%p120) target = $region16
    $region15: #{_mask_loss_forward.2} parent=5 // pred_region
      // Predicated region
      $region17: #{_mask_loss_forward.2} parent=15 // pred_check
        %p123 = pneg %p42
      $region18: #{_mask_loss_forward.2} parent=15 // pred_check_branch
        %125 = sbr.rel (%p123) target = $region20
      $region19: #{_mask_loss_forward.2} parent=15 // pred_region
        %p126 = scmp.lt.s32.totalorder %s15, 5
        %s127 = scalar_select %p126, %s15, 5
        %p128 = scmp.lt.s32.totalorder %s16, 0
        %s129 = scalar_select %p128, %s16, 0
        %s130 = smul.addr %s127, 3
        %s131 = sadd.s32 %s129, %s130
        %s132 = smul.addr %s131, 2
        %s133 = scalar_lea.vmem %s0, %s132
      $region20: #{_mask_loss_forward.2} parent=15 // pred_fallthru
        _
      // Predicated region
      $region21: #{_mask_loss_forward.2} parent=15 // pred_check
        %p134 = pneg %p70
      $region22: #{_mask_loss_forward.2} parent=15 // pred_check_branch
        %136 = sbr.rel (%p134) target = $region24
      $region23: #{_mask_loss_forward.2} parent=15 // pred_region
        %p137 = scmp.lt.s32.totalorder %s15, 5
        %s138 = scalar_select %p137, %s15, 5
        %p139 = scmp.lt.s32.totalorder %s16, 0
        %s140 = scalar_select %p139, %s16, 0
        %s141 = smul.addr %s138, 3
        %s142 = sadd.s32 %s140, %s141
        %s143 = smul.addr %s142, 2
        %s144 = scalar_lea.vmem %s1, %s143
      $region24: #{_mask_loss_forward.2} parent=15 // pred_fallthru
        _
    $region16: #{_mask_loss_forward.2} parent=5 // pred_fallthru
      _
    %p145 = scmp.le.s32.totalorder 1, %s8
    %p146 = scmp.lt.s32.totalorder %s8, 7
    %p147 = pnand %p145, %p146
    %p148 = pneg %p147
    // Predicated region
    $region25: #{_mask_loss_forward.2} parent=5 // pred_check
      _
    $region26: #{_mask_loss_forward.2} parent=5 // pred_check_branch
      %150 = sbr.rel (%p147) target = $region28
    $region27: #{_mask_loss_forward.2} parent=5 // pred_region
      %s151 = ssub.s32 %s8, 1
      %p152 = scmp.lt.s32.totalorder %s17, 5
      %s153 = scalar_select %p152, %s17, 5
      %p154 = scmp.lt.s32.totalorder %s18, 0
      %s155 = scalar_select %p154, %s18, 0
      %s156 = smul.addr %s153, 3
      %s157 = sadd.s32 %s155, %s156
      %s158 = smul.addr %s157, 2
      %s159 = scalar_lea.vmem %s0, %s158
      %p160 = pneg %p48
      %p161 = pneg %p45
      %p162 = scmp.lt.s32.totalorder %s17, 5
      %s163 = scalar_select %p162, %s17, 5
      %p164 = scmp.lt.s32.totalorder %s18, 0
      %s165 = scalar_select %p164, %s18, 0
      %s166 = smul.addr %s163, 3
      %s167 = sadd.s32 %s165, %s166
      %s168 = smul.addr %s167, 2
      %s169 = scalar_lea.vmem %s1, %s168
      %p170 = pneg %p76
      %p171 = pneg %p73
      %p172 = pneg %p104
      %p173 = pneg %p101
      %p174 = scmp.lt.s32.totalorder %s17, 5
      %s175 = scalar_select %p174, %s17, 5
      %p176 = scmp.lt.s32.totalorder %s18, 0
      %s177 = scalar_select %p176, %s18, 0
      %s178 = sadd.s32 %s177, %s175
      %s179 = smul.addr %s178, 2
      %s180 = scalar_lea.vmem %s2, %s179
      %p181 = scmp.lt.s32.totalorder %s17, 5
      %s182 = scalar_select %p181, %s17, 5
      %p183 = scmp.lt.s32.totalorder %s18, 0
      %s184 = scalar_select %p183, %s18, 0
      %s185 = smul.addr %s182, 3
      %s186 = sadd.s32 %s184, %s185
      %s187 = smul.addr %s186, 2
      %s188 = scalar_lea.vmem %s0, %s187
      %p189 = scmp.lt.s32.totalorder %s17, 5
      %s190 = scalar_select %p189, %s17, 5
      %p191 = scmp.lt.s32.totalorder %s18, 0
      %s192 = scalar_select %p191, %s18, 0
      %s193 = smul.addr %s190, 3
      %s194 = sadd.s32 %s192, %s193
      %s195 = smul.addr %s194, 2
      %s196 = scalar_lea.vmem %s1, %s195
      %p197 = scmp.lt.s32.totalorder %s17, 5
      %s198 = scalar_select %p197, %s17, 5
      %p199 = scmp.lt.s32.totalorder %s18, 0
      %s200 = scalar_select %p199, %s18, 0
      %s201 = sadd.s32 %s200, %s198
      %s202 = smul.addr %s201, 2
      %s203 = scalar_lea.vmem %s2, %s202
      %v204 = vld [vmem:[%s188] sm:$0x3]
      %v205 = vld [vmem:[%s188 + $0x2] sm:$0x3]
      %v206 = vld [vmem:[%s188 + $0x4] sm:$0x3]
      %v207 = vld [vmem:[%s196] sm:$0x3]
      %v208 = vld [vmem:[%s196 + $0x2] sm:$0x3]
      %v209 = vld [vmem:[%s196 + $0x4] sm:$0x3]
      %v210 = vsub.f32 %v204, %v207
      %v211 = vsub.f32 %v205, %v208
      %v212 = vsub.f32 %v206, %v209
      %v213 = vmul.f32 %v210, %v210
      %v214 = vmul.f32 %v211, %v211
      %v215 = vmul.f32 %v212, %v212
      %vm216 = vcmask 1041408
      %v217 = vsel %vm216, %v213, 0.0
      %v218 = vsel %vm216, %v214, 0.0
      %v219 = vadd.f32 %v217, %v218
      %v220 = vsel %vm216, %v215, 0.0
      %v221 = vadd.f32 %v219, %v220
      %v222 = vmul.f32 %v221, 333.33334
      %v223 = vmax.f32 %v222, 0.0
      %v224 = vmin.f32 %v223, 1.0
      %225 = vst [vmem:[%s203] sm:$0x3] %v224
      %p226 = scmp.lt.s32.totalorder %s17, 5
      %s227 = scalar_select %p226, %s17, 5
      %p228 = scmp.lt.s32.totalorder %s18, 0
      %s229 = scalar_select %p228, %s18, 0
      %s230 = sadd.s32 %s229, %s227
      %s231 = smul.addr %s230, 2
      %s232 = scalar_lea.vmem %s2, %s231
      // Predicated region
      $region29: #{_mask_loss_forward.2} parent=27 // pred_check
        %p233 = pneg %p101
      $region30: #{_mask_loss_forward.2} parent=27 // pred_check_branch
        %235 = sbr.rel (%p233) target = $region32
      $region31: #{_mask_loss_forward.2} parent=27 // pred_region
        _
      $region32: #{_mask_loss_forward.2} parent=27 // pred_fallthru
        _
    $region28: #{_mask_loss_forward.2} parent=5 // pred_fallthru
      _
    %p236 = scmp.le.s32.totalorder 2, %s8
    // Predicated region
    $region33: #{_mask_loss_forward.2} parent=5 // pred_check
      %p237 = pneg %p236
    $region34: #{_mask_loss_forward.2} parent=5 // pred_check_branch
      %239 = sbr.rel (%p237) target = $region36
    $region35: #{_mask_loss_forward.2} parent=5 // pred_region
      %s240 = ssub.s32 %s8, 2
      // Predicated region
      $region37: #{_mask_loss_forward.2} parent=35 // pred_check
        %p241 = pneg %p107
      $region38: #{_mask_loss_forward.2} parent=35 // pred_check_branch
        %243 = sbr.rel (%p241) target = $region40
      $region39: #{_mask_loss_forward.2} parent=35 // pred_region
        %p244 = scmp.lt.s32.totalorder %s19, 5
        %s245 = scalar_select %p244, %s19, 5
        %p246 = scmp.lt.s32.totalorder %s20, 0
        %s247 = scalar_select %p246, %s20, 0
        %s248 = sadd.s32 %s247, %s245
        %s249 = smul.addr %s248, 2
        %s250 = scalar_lea.vmem %s2, %s249
      $region40: #{_mask_loss_forward.2} parent=35 // pred_fallthru
        _
    $region36: #{_mask_loss_forward.2} parent=5 // pred_fallthru
      _
  $region6: #{_mask_loss_forward.2} parent=0 // loop_footer
    %s12 = sadd.s32 1, %s8
  $region7: #{_mask_loss_forward.2} parent=0 // loop_footer_branch
    %7 = sbr.rel target = $region3
  $region8: #{_mask_loss_forward.2} parent=0 // loop_exit
    _

// kernel: _mask_loss_forward.3
$region0: #{_mask_loss_forward.3}
  #allocation0 [shape = 'u32[]', space=smem, size = 0x4, offset = 0x4, fixed_abs, tag = 'smem constant byte address 0x4 - core index']
  #allocation1 [shape = 'u32[144,128]{1,0:T(1,128)}', space=vmem, size = 0x12000, scoped, tag = 'internal scratch']
  %s0 = inlined_call_operand.vmem [shape: f32[6,3,2,128], index: 0, kind: input, shape index: {}]
  %s1 = inlined_call_operand.vmem [shape: f32[6,1,2,128], index: 1, kind: input, shape index: {}]
  %s2 = inlined_call_operand.vmem [shape: f32[6,1,2,128], index: 2, kind: output, shape index: {}]
  %s3 = sld [smem:[#allocation0]]
  $region45: #{_mask_loss_forward.3} parent=0
    _
  %s5 = ssub.s32 1, %s3
  %s6 = scalar_select 0, %s5, %s3
  loop: start=0, step=1, limit=8
  $region2: #{_mask_loss_forward.3} parent=0 // loop_pre_header
    _
  $region3: #{_mask_loss_forward.3} parent=0 // loop_header
    %s8 = sphi 0, %s12
    %p9 = scmp.ge.s32.totalorder %s8, 8
    %s15 = sphi 0, %s34
    %s16 = sphi 0, %s30
    %s17 = sphi 0, %s26
    %s18 = sphi 0, %s15
    %s19 = sphi 0, %s16
    %s20 = sphi 0, %s17
    %s21 = sphi 0, %s18
    %s22 = sphi 0, %s19
    %s23 = sphi 0, %s20
    %s45 = sphi 0, %s47
    %s48 = sphi 0, %s45
    %s49 = sphi 0, %s48
    %s65 = sphi 0, %s49
    %s79 = sphi 0, %s81
    %s82 = sphi 0, %s79
    %s83 = sphi 0, %s82
    %s99 = sphi 0, %s83
    %s107 = sphi 0, %s109
    %s110 = sphi 0, %s107
    %s111 = sphi 0, %s110
    %s127 = sphi 0, %s111
  $region4: #{_mask_loss_forward.3} parent=0 // loop_header_branch
    %11 = sbr.rel (%p9) target = $region8
  $region5: #{_mask_loss_forward.3} parent=0 // loop_body
    %s13 = ssub.s32 %s8, 1
    %s14 = ssub.s32 %s8, 2
    %s24 = sadd.s32 1, %s17
    %p25 = scmp.ge.s32.totalorder %s24, 1
    %s26 = scalar_select %p25, 0, %s24
    %s27 = sadd.s32 1, %s16
    %s28 = scalar_select %p25, %s27, %s16
    %p29 = scmp.ge.s32.totalorder %s28, 1
    %s30 = scalar_select %p29, 0, %s28
    %s31 = sadd.s32 1, %s15
    %s32 = scalar_select %p29, %s31, %s15
    %p33 = scmp.ge.s32.totalorder %s32, 6
    %s34 = scalar_select %p33, 0, %s32
    %s35 = sadd.s32 %s16, %s17
    %p36 = scmp.lt.s32.totalorder %s35, 0
    %s37 = scalar_select %p36, %s35, 0
    %s38 = sadd.s32 %s30, %s26
    %p39 = scmp.lt.s32.totalorder %s38, 0
    %s40 = scalar_select %p39, %s38, 0
    %s41 = ssub.s32 %s15, %s34
    %s42 = ssub.s32 %s37, %s40
    %s43 = sor.u32 %s41, %s42
    %p44 = scmp.eq.s32.totalorder %s43, 0
    %s46 = sadd.s32 %s45, 1
    %s47 = scalar_select %p44, %s45, %s46
    %p50 = pneg %p44
    %p51 = scmp.eq.s32.totalorder %s8, 5
    %p52 = por %p50, %p51
    %p53 = scmp.ne.s32.totalorder %s45, %s48
    %p54 = scmp.eq.s32.totalorder %s8, 0
    %p55 = por %p53, %p54
    %p56 = scmp.ne.s32.totalorder %s45, %s48
    %p57 = scmp.eq.s32.totalorder %s13, 5
    %p58 = por %p56, %p57
    %p59 = scmp.ne.s32.totalorder %s48, %s49
    %p60 = scmp.eq.s32.totalorder %s13, 0
    %p61 = por %p59, %p60
    %p62 = scmp.ne.s32.totalorder %s48, %s49
    %p63 = scmp.eq.s32.totalorder %s14, 5
    %p64 = por %p62, %p63
    %p66 = scmp.ne.s32.totalorder %s49, %s65
    %p67 = scmp.eq.s32.totalorder %s14, 0
    %p68 = por %p66, %p67
    %s69 = sadd.s32 %s16, %s17
    %p70 = scmp.lt.s32.totalorder %s69, 0
    %s71 = scalar_select %p70, %s69, 0
    %s72 = sadd.s32 %s30, %s26
    %p73 = scmp.lt.s32.totalorder %s72, 0
    %s74 = scalar_select %p73, %s72, 0
    %s75 = ssub.s32 %s15, %s34
    %s76 = ssub.s32 %s71, %s74
    %s77 = sor.u32 %s75, %s76
    %p78 = scmp.eq.s32.totalorder %s77, 0
    %s80 = sadd.s32 %s79, 1
    %s81 = scalar_select %p78, %s79, %s80
    %p84 = pneg %p78
    %p85 = scmp.eq.s32.totalorder %s8, 5
    %p86 = por %p84, %p85
    %p87 = scmp.ne.s32.totalorder %s79, %s82
    %p88 = scmp.eq.s32.totalorder %s8, 0
    %p89 = por %p87, %p88
    %p90 = scmp.ne.s32.totalorder %s79, %s82
    %p91 = scmp.eq.s32.totalorder %s13, 5
    %p92 = por %p90, %p91
    %p93 = scmp.ne.s32.totalorder %s82, %s83
    %p94 = scmp.eq.s32.totalorder %s13, 0
    %p95 = por %p93, %p94
    %p96 = scmp.ne.s32.totalorder %s82, %s83
    %p97 = scmp.eq.s32.totalorder %s14, 5
    %p98 = por %p96, %p97
    %p100 = scmp.ne.s32.totalorder %s83, %s99
    %p101 = scmp.eq.s32.totalorder %s14, 0
    %p102 = por %p100, %p101
    %s103 = ssub.s32 %s15, %s34
    %s104 = ssub.s32 %s16, %s30
    %s105 = sor.u32 %s103, %s104
    %p106 = scmp.eq.s32.totalorder %s105, 0
    %s108 = sadd.s32 %s107, 1
    %s109 = scalar_select %p106, %s107, %s108
    %p112 = pneg %p106
    %p113 = scmp.eq.s32.totalorder %s8, 5
    %p114 = por %p112, %p113
    %p115 = scmp.ne.s32.totalorder %s107, %s110
    %p116 = scmp.eq.s32.totalorder %s8, 0
    %p117 = por %p115, %p116
    %p118 = scmp.ne.s32.totalorder %s107, %s110
    %p119 = scmp.eq.s32.totalorder %s13, 5
    %p120 = por %p118, %p119
    %p121 = scmp.ne.s32.totalorder %s110, %s111
    %p122 = scmp.eq.s32.totalorder %s13, 0
    %p123 = por %p121, %p122
    %p124 = scmp.ne.s32.totalorder %s110, %s111
    %p125 = scmp.eq.s32.totalorder %s14, 5
    %p126 = por %p124, %p125
    %p128 = scmp.ne.s32.totalorder %s111, %s127
    %p129 = scmp.eq.s32.totalorder %s14, 0
    %p130 = por %p128, %p129
    %p131 = scmp.le.s32.totalorder 1, %s8
    %p132 = scmp.lt.s32.totalorder %s8, 7
    %p133 = pnand %p131, %p132
    %p134 = pneg %p133
    // Predicated region
    $region9: #{_mask_loss_forward.3} parent=5 // pred_check
      _
    $region10: #{_mask_loss_forward.3} parent=5 // pred_check_branch
      %136 = sbr.rel (%p133) target = $region12
    $region11: #{_mask_loss_forward.3} parent=5 // pred_region
      %s137 = ssub.s32 %s8, 1
    $region12: #{_mask_loss_forward.3} parent=5 // pred_fallthru
      _
    %p138 = scmp.lt.s32.totalorder %s8, 6
    // Predicated region
    $region13: #{_mask_loss_forward.3} parent=5 // pred_check
      %p139 = pneg %p138
    $region14: #{_mask_loss_forward.3} parent=5 // pred_check_branch
      %141 = sbr.rel (%p139) target = $region16
    $region15: #{_mask_loss_forward.3} parent=5 // pred_region
      // Predicated region
      $region17: #{_mask_loss_forward.3} parent=15 // pred_check
        %p142 = pneg %p55
      $region18: #{_mask_loss_forward.3} parent=15 // pred_check_branch
        %144 = sbr.rel (%p142) target = $region20
      $region19: #{_mask_loss_forward.3} parent=15 // pred_region
        %s145 = sadd.s32 %s16, %s17
        %p146 = scmp.lt.s32.totalorder %s145, 0
        %s147 = scalar_select %p146, %s145, 0
        %p148 = scmp.lt.s32.totalorder %s15, 5
        %s149 = scalar_select %p148, %s15, 5
        %p150 = scmp.lt.s32.totalorder %s147, 0
        %s151 = scalar_select %p150, %s147, 0
        %s152 = smul.addr %s149, 3
        %s153 = sadd.s32 %s151, %s152
        %s154 = smul.addr %s153, 2
        %s155 = scalar_lea.vmem %s0, %s154
        %s156 = sadd.s32 %s16, %s17
        %p157 = scmp.lt.s32.totalorder %s156, 0
        %s158 = scalar_select %p157, %s156, 0
      $region20: #{_mask_loss_forward.3} parent=15 // pred_fallthru
        _
      // Predicated region
      $region21: #{_mask_loss_forward.3} parent=15 // pred_check
        %p159 = pneg %p89
      $region22: #{_mask_loss_forward.3} parent=15 // pred_check_branch
        %161 = sbr.rel (%p159) target = $region24
      $region23: #{_mask_loss_forward.3} parent=15 // pred_region
        %s162 = sadd.s32 %s16, %s17
        %p163 = scmp.lt.s32.totalorder %s162, 0
        %s164 = scalar_select %p163, %s162, 0
        %p165 = scmp.lt.s32.totalorder %s15, 5
        %s166 = scalar_select %p165, %s15, 5
        %p167 = scmp.lt.s32.totalorder %s164, 0
        %s168 = scalar_select %p167, %s164, 0
        %s169 = sadd.s32 %s168, %s166
        %s170 = smul.addr %s169, 2
        %s171 = scalar_lea.vmem %s1, %s170
        %s172 = sadd.s32 %s16, %s17
        %p173 = scmp.lt.s32.totalorder %s172, 0
        %s174 = scalar_select %p173, %s172, 0
      $region24: #{_mask_loss_forward.3} parent=15 // pred_fallthru
        _
    $region16: #{_mask_loss_forward.3} parent=5 // pred_fallthru
      _
    %p175 = scmp.le.s32.totalorder 1, %s8
    %p176 = scmp.lt.s32.totalorder %s8, 7
    %p177 = pnand %p175, %p176
    %p178 = pneg %p177
    // Predicated region
    $region25: #{_mask_loss_forward.3} parent=5 // pred_check
      _
    $region26: #{_mask_loss_forward.3} parent=5 // pred_check_branch
      %180 = sbr.rel (%p177) target = $region28
    $region27: #{_mask_loss_forward.3} parent=5 // pred_region
      %s181 = ssub.s32 %s8, 1
      %s182 = sadd.s32 %s19, %s20
      %p183 = scmp.lt.s32.totalorder %s182, 0
      %s184 = scalar_select %p183, %s182, 0
      %p185 = scmp.lt.s32.totalorder %s18, 5
      %s186 = scalar_select %p185, %s18, 5
      %p187 = scmp.lt.s32.totalorder %s184, 0
      %s188 = scalar_select %p187, %s184, 0
      %s189 = smul.addr %s186, 3
      %s190 = sadd.s32 %s188, %s189
      %s191 = smul.addr %s190, 2
      %s192 = scalar_lea.vmem %s0, %s191
      %p193 = pneg %p61
      %p194 = pneg %p58
      %s195 = sadd.s32 %s19, %s20
      %p196 = scmp.lt.s32.totalorder %s195, 0
      %s197 = scalar_select %p196, %s195, 0
      %p198 = scmp.lt.s32.totalorder %s18, 5
      %s199 = scalar_select %p198, %s18, 5
      %p200 = scmp.lt.s32.totalorder %s197, 0
      %s201 = scalar_select %p200, %s197, 0
      %s202 = sadd.s32 %s201, %s199
      %s203 = smul.addr %s202, 2
      %s204 = scalar_lea.vmem %s1, %s203
      %p205 = pneg %p95
      %p206 = pneg %p92
      %p207 = pneg %p123
      %p208 = pneg %p120
      %p209 = scmp.lt.s32.totalorder %s18, 5
      %s210 = scalar_select %p209, %s18, 5
      %p211 = scmp.lt.s32.totalorder %s19, 0
      %s212 = scalar_select %p211, %s19, 0
      %s213 = sadd.s32 %s212, %s210
      %s214 = smul.addr %s213, 2
      %s215 = scalar_lea.vmem %s2, %s214
      %s216 = sadd.s32 %s19, %s20
      %p217 = scmp.lt.s32.totalorder %s216, 0
      %s218 = scalar_select %p217, %s216, 0
      %p219 = scmp.lt.s32.totalorder %s18, 5
      %s220 = scalar_select %p219, %s18, 5
      %p221 = scmp.lt.s32.totalorder %s218, 0
      %s222 = scalar_select %p221, %s218, 0
      %s223 = smul.addr %s220, 3
      %s224 = sadd.s32 %s222, %s223
      %s225 = smul.addr %s224, 2
      %s226 = scalar_lea.vmem %s0, %s225
      %s227 = sadd.s32 %s19, %s20
      %p228 = scmp.lt.s32.totalorder %s227, 0
      %s229 = scalar_select %p228, %s227, 0
      %s230 = sadd.s32 %s19, %s20
      %p231 = scmp.lt.s32.totalorder %s230, 0
      %s232 = scalar_select %p231, %s230, 0
      %p233 = scmp.lt.s32.totalorder %s18, 5
      %s234 = scalar_select %p233, %s18, 5
      %p235 = scmp.lt.s32.totalorder %s232, 0
      %s236 = scalar_select %p235, %s232, 0
      %s237 = sadd.s32 %s236, %s234
      %s238 = smul.addr %s237, 2
      %s239 = scalar_lea.vmem %s1, %s238
      %s240 = sadd.s32 %s19, %s20
      %p241 = scmp.lt.s32.totalorder %s240, 0
      %s242 = scalar_select %p241, %s240, 0
      %p243 = scmp.lt.s32.totalorder %s18, 5
      %s244 = scalar_select %p243, %s18, 5
      %p245 = scmp.lt.s32.totalorder %s19, 0
      %s246 = scalar_select %p245, %s19, 0
      %s247 = sadd.s32 %s246, %s244
      %s248 = smul.addr %s247, 2
      %s249 = scalar_lea.vmem %s2, %s248
      %p250 = scmp.eq.s32.totalorder %s20, 0
      // Predicated region
      $region29: #{_mask_loss_forward.3} parent=27 // pred_check
        %p251 = pneg %p250
      $region30: #{_mask_loss_forward.3} parent=27 // pred_check_branch
        %253 = sbr.rel (%p251) target = $region32
      $region31: #{_mask_loss_forward.3} parent=27 // pred_region
        %254 = vst [vmem:[%s249] sm:$0x3] 0.0
      $region32: #{_mask_loss_forward.3} parent=27 // pred_fallthru
        _
      %s255 = sadd.s32 %s19, %s20
      %s256 = smul.u32 %s255, 2
      %s257 = ssub.s32 2, %s256
      %v258 = vlaneseq
      %v259 = vshrl.u32 %v258, 7
      %v260 = vstv %s257
      %vm261 = vcmp.lt.s32.totalorder %v259, %v260
      %v262 = vld [vmem:[%s226] sm:$0x3]
      %v263 = vld [vmem:[%s226 + $0x2] sm:$0x3]
      %v264 = vld [vmem:[%s226 + $0x4] sm:$0x3]
      %v265 = vld [vmem:[%s239] sm:$0x3]
      %v266 = vsub.f32 %v262, %v265
      %v267 = vsub.f32 %v263, %v265
      %v268 = vsub.f32 %v264, %v265
      %v269 = vand.u32 2147483647, %v266
      %v270 = vand.u32 2147483647, %v267
      %v271 = vand.u32 2147483647, %v268
      %vm272 = vcmask 1041408
      %v273 = vsel %vm272, %v269, 0.0
      %v274 = vsel %vm272, %v270, 0.0
      %v275 = vadd.f32 %v273, %v274
      %v276 = vsel %vm272, %v271, 0.0
      %v277 = vadd.f32 %v275, %v276
      %v278 = vsel %vm261, %v277, 0.0
      %v279 = vld [vmem:[%s249] sm:$0x3]
      %v280 = vadd.f32 %v279, %v278
      %281 = vst [vmem:[%s249] sm:$0x3] %v280
      %p282 = scmp.lt.s32.totalorder %s18, 5
      %s283 = scalar_select %p282, %s18, 5
      %p284 = scmp.lt.s32.totalorder %s19, 0
      %s285 = scalar_select %p284, %s19, 0
      %s286 = sadd.s32 %s285, %s283
      %s287 = smul.addr %s286, 2
      %s288 = scalar_lea.vmem %s2, %s287
      // Predicated region
      $region33: #{_mask_loss_forward.3} parent=27 // pred_check
        %p289 = pneg %p120
      $region34: #{_mask_loss_forward.3} parent=27 // pred_check_branch
        %291 = sbr.rel (%p289) target = $region36
      $region35: #{_mask_loss_forward.3} parent=27 // pred_region
        _
      $region36: #{_mask_loss_forward.3} parent=27 // pred_fallthru
        _
    $region28: #{_mask_loss_forward.3} parent=5 // pred_fallthru
      _
    %p292 = scmp.le.s32.totalorder 2, %s8
    // Predicated region
    $region37: #{_mask_loss_forward.3} parent=5 // pred_check
      %p293 = pneg %p292
    $region38: #{_mask_loss_forward.3} parent=5 // pred_check_branch
      %295 = sbr.rel (%p293) target = $region40
    $region39: #{_mask_loss_forward.3} parent=5 // pred_region
      %s296 = ssub.s32 %s8, 2
      // Predicated region
      $region41: #{_mask_loss_forward.3} parent=39 // pred_check
        %p297 = pneg %p126
      $region42: #{_mask_loss_forward.3} parent=39 // pred_check_branch
        %299 = sbr.rel (%p297) target = $region44
      $region43: #{_mask_loss_forward.3} parent=39 // pred_region
        %p300 = scmp.lt.s32.totalorder %s21, 5
        %s301 = scalar_select %p300, %s21, 5
        %p302 = scmp.lt.s32.totalorder %s22, 0
        %s303 = scalar_select %p302, %s22, 0
        %s304 = sadd.s32 %s303, %s301
        %s305 = smul.addr %s304, 2
        %s306 = scalar_lea.vmem %s2, %s305
      $region44: #{_mask_loss_forward.3} parent=39 // pred_fallthru
        _
    $region40: #{_mask_loss_forward.3} parent=5 // pred_fallthru
      _
  $region6: #{_mask_loss_forward.3} parent=0 // loop_footer
    %s12 = sadd.s32 1, %s8
  $region7: #{_mask_loss_forward.3} parent=0 // loop_footer_branch
    %7 = sbr.rel target = $region3
  $region8: #{_mask_loss_forward.3} parent=0 // loop_exit
    _

</llo_original>
